<compile_context>
chip_gen: v7x
topology: tpu7x:2x2x1
jax: 0.10.0
libtpu: 0.0.40
codegen_flags: <defaults>
</compile_context>

<pallas_src>
import math
import functools

import numpy as np
import jax
import jax.numpy as jnp
from jax import lax
from jax.experimental import pallas as pl
from jax.experimental.pallas import tpu as pltpu


_NN = (((1,), (0,)), ((), ()))   # A @ B
_NT = (((1,), (1,)), ((), ()))   # A @ B.T (contract last dims, no transpose op)


def _attention_head_kernel(x_ref, wq_ref, wk_ref, wv_ref, o_ref):
    """One batch tile of single-head attention.

    x_ref : (Bt, S, D)  input tile, already in the MXU operand dtype
    w*_ref: (D, D)      pre-transposed weights (y = x @ w); 1/sqrt(D) folded
                        into wq_ref
    o_ref : (Bt, S, D)  output tile, original input dtype
    """
    bt = x_ref.shape[0]
    cd = wq_ref.dtype                        # MXU operand dtype (bf16 or f32)

    wq = wq_ref[...]
    wk = wk_ref[...]
    wv = wv_ref[...]

    # Static per-batch-element loop (bt is small; capped in the wrapper).
    # Everything is a plain 2-D dot_general: no reshape of the 3-D tile and
    # no sub-128-lane slicing of a fused QKV result.
    for b in range(bt):
        xb = x_ref[b]                                               # (S, D)

        q = lax.dot_general(xb, wq, _NN, preferred_element_type=jnp.float32)
        k = lax.dot_general(xb, wk, _NN, preferred_element_type=jnp.float32)
        v = lax.dot_general(xb, wv, _NN, preferred_element_type=jnp.float32)

        # scores = (x Wq^T / sqrt(D)) @ (x Wk^T)^T ; scale already in wq.
        s = lax.dot_general(q.astype(cd), k.astype(cd), _NT,
                            preferred_element_type=jnp.float32)     # (S, S)

        # Numerically stable softmax in f32 (VPU + EUP).
        m = jnp.max(s, axis=-1, keepdims=True)
        e = jnp.exp(s - m)
        denom = jnp.sum(e, axis=-1, keepdims=True)
        p = e * pl.reciprocal(denom, approx=True)                   # (S, S)

        out = lax.dot_general(p.astype(cd), v.astype(cd), _NN,
                              preferred_element_type=jnp.float32)   # (S, D)
        o_ref[b] = out.astype(o_ref.dtype)


def _pick_block_b(B, S, D, x_bytes, out_bytes, w_bytes,
                  vmem_budget_bytes, max_unroll):
    """Largest divisor of B (<= max_unroll) whose per-step tile fits VMEM."""

    def step_bytes(bt):
        x_b = 2 * bt * S * D * x_bytes               # double-buffered input
        o_b = 2 * bt * S * D * out_bytes             # double-buffered output
        w_b = 2 * 3 * D * D * w_bytes                # double-buffered weights
        live = bt * (3 * S * D + S * S + S * D) * 4  # q,k,v + scores + out f32
        return x_b + o_b + w_b + live

    best = 1
    for bt in range(1, min(B, max_unroll) + 1):
        if B % bt == 0 and step_bytes(bt) <= vmem_budget_bytes:
            best = bt
    return best


def prepare_attention_head_weights(wq, wk, wv, dtype=None):
    """Host-side weight prep, run ONCE outside jit (NOT constant-folded when
    the weights are traced jit arguments):
      - transpose the nn.Linear (out, in) weights so the kernel does x @ W,
      - fold the 1/sqrt(D) attention scale into Wq,
      - optionally pre-cast to the MXU operand dtype (e.g. jnp.bfloat16).
    """
    d = wq.shape[-1]
    scale = 1.0 / math.sqrt(d)
    wq_t = jnp.asarray(wq).T * scale
    wk_t = jnp.asarray(wk).T
    wv_t = jnp.asarray(wv).T
    if dtype is not None:
        wq_t, wk_t, wv_t = (w.astype(dtype) for w in (wq_t, wk_t, wv_t))
    return wq_t, wk_t, wv_t


@functools.partial(jax.jit, static_argnames=("matmul_dtype", "block_b"))
def attention_head(x, wq_t, wk_t, wv_t, *, matmul_dtype=jnp.bfloat16,
                   block_b=None):
    """Single attention head.

    x              : (B, S, D)
    wq_t/wk_t/wv_t : (D, D) outputs of prepare_attention_head_weights()
    matmul_dtype   : MXU operand dtype (bf16 recommended on v5e/v6e/v7x; the
                     MXU is bf16-native and f32xf32 is emulated).  None keeps
                     the input dtype.  Accumulation and softmax are always f32.
    Returns (B, S, D) in x.dtype.
    """
    B, S, D = x.shape
    out_dtype = x.dtype
    cd = matmul_dtype if matmul_dtype is not None else x.dtype

    if block_b is None:
        # VMEM-driven block size with headroom under the smallest scoped-VMEM
        # default (16 MiB on v5e); capped to bound the static per-batch unroll.
        vmem_budget = 12 * 1024 * 1024
        block_b = _pick_block_b(B, S, D,
                                np.dtype(cd).itemsize,
                                np.dtype(out_dtype).itemsize,
                                np.dtype(cd).itemsize,
                                vmem_budget, max_unroll=8)
        # v7x has two TensorCores: splitting the (single) grid step across
        # them only pays off when per-step work clearly exceeds the ~0.35us
        # fixed step overhead.  Harmless no-op for tiny workloads / v5e / v6e.
        step_flops = 2 * block_b * S * (3 * D * D + 2 * S * D)
        if (B // block_b) == 1 and B % 2 == 0 and step_flops > int(1e8):
            block_b = max(1, B // 2)
    assert B % block_b == 0, "block_b must divide B"
    grid = (B // block_b,)

    # Cast MXU operands once per call (halves x DMA bytes for bf16).
    x_mm = x.astype(cd)
    wq_c = wq_t.astype(cd)
    wk_c = wk_t.astype(cd)
    wv_c = wv_t.astype(cd)

    flops = 2 * B * S * (3 * D * D + 2 * S * D)
    transcendentals = B * S * S                       # exp in the softmax
    bytes_accessed = (B * S * D * np.dtype(cd).itemsize          # x in
                      + 3 * D * D * np.dtype(cd).itemsize        # weights in
                      + B * S * D * np.dtype(out_dtype).itemsize)  # out

    return pl.pallas_call(
        _attention_head_kernel,
        out_shape=jax.ShapeDtypeStruct((B, S, D), out_dtype),
        grid_spec=pltpu.PrefetchScalarGridSpec(
            num_scalar_prefetch=0,
            grid=grid,
            in_specs=[
                pl.BlockSpec((block_b, S, D), lambda b: (b, 0, 0)),  # x tile
                pl.BlockSpec((D, D), lambda b: (0, 0)),   # Wq^T * 1/sqrt(D)
                pl.BlockSpec((D, D), lambda b: (0, 0)),   # Wk^T
                pl.BlockSpec((D, D), lambda b: (0, 0)),   # Wv^T
            ],
            out_specs=pl.BlockSpec((block_b, S, D), lambda b: (b, 0, 0)),
        ),
        compiler_params=pltpu.CompilerParams(
            dimension_semantics=("parallel",),
        ),
        cost_estimate=pl.CostEstimate(
            flops=flops,
            transcendentals=transcendentals,
            bytes_accessed=bytes_accessed,
        ),
    )(x_mm, wq_c, wk_c, wv_c)


def _reference(x, wq, wk, wv):
    q = jnp.einsum("bsd,ed->bse", x, wq)
    k = jnp.einsum("bsd,ed->bse", x, wk)
    v = jnp.einsum("bsd,ed->bse", x, wv)
    s = jnp.einsum("bqd,bkd->bqk", q, k) / math.sqrt(q.shape[-1])
    p = jax.nn.softmax(s, axis=-1)
    return jnp.einsum("bqk,bkd->bqd", p, v)


if __name__ == "__main__":
    # Shapes consistent with the module: batch=2, seq=8, embed_per_head_dim=32.
    B, S, D = 2, 8, 32
    key = jax.random.PRNGKey(0)
    kx, kq, kk, kv = jax.random.split(key, 4)

    x = jax.random.normal(kx, (B, S, D), dtype=jnp.float32)
    # PyTorch nn.Linear default init: U(-1/sqrt(in), 1/sqrt(in)).
    bound = 1.0 / math.sqrt(D)
    wq = jax.random.uniform(kq, (D, D), jnp.float32, -bound, bound)
    wk = jax.random.uniform(kk, (D, D), jnp.float32, -bound, bound)
    wv = jax.random.uniform(kv, (D, D), jnp.float32, -bound, bound)

    # One-time (outside jit) weight prep: transpose + fold 1/sqrt(D) into Wq.
    wq_t, wk_t, wv_t = prepare_attention_head_weights(wq, wk, wv)

    ref = _reference(x, wq, wk, wv)

    # f32 MXU operands: closely matches the PyTorch module (tolerance covers
    # the approximate EUP reciprocal in the softmax denominator).
    out_f32 = jax.block_until_ready(
        attention_head(x, wq_t, wk_t, wv_t, matmul_dtype=None))
    assert out_f32.shape == (B, S, D)
    assert jnp.allclose(out_f32, ref, atol=5e-3, rtol=5e-3), "f32 path mismatch"

    # bf16 MXU operands / f32 accumulation + f32 softmax: the fast path on
    # v5e/v6e/v7x; tolerance reflects bf16 operand rounding.
    out_bf16 = jax.block_until_ready(
        attention_head(x, wq_t, wk_t, wv_t, matmul_dtype=jnp.bfloat16))
    assert out_bf16.shape == (B, S, D)
    assert jnp.allclose(out_bf16, ref, atol=5e-2, rtol=5e-2), "bf16 path mismatch"

    print("KERNEL_OK")
</pallas_src>

<mosaic_0001>
module attributes {stable_mosaic.version = 11 : i64} {
  func.func @_attention_head_kernel(%arg0: i32, %arg1: memref<2x8x32xf32, #tpu.memory_space<vmem>>, %arg2: memref<32x32xf32, #tpu.memory_space<vmem>>, %arg3: memref<32x32xf32, #tpu.memory_space<vmem>>, %arg4: memref<32x32xf32, #tpu.memory_space<vmem>>, %arg5: memref<2x8x32xf32, #tpu.memory_space<vmem>>) attributes {dimension_semantics = [#tpu.dimension_semantics<parallel>], iteration_bounds = array<i64: 1>, scalar_prefetch = 0 : i64, scratch_operands = 0 : i64, tpu.core_type = #tpu.core_type<tc>, window_params = [{transform_indices = @transform_0, window_bounds = array<i64: 2, 8, 32>}, {pipeline_mode = #tpu.pipeline_mode<synchronous>, transform_indices = @transform_1, window_bounds = array<i64: 32, 32>}, {pipeline_mode = #tpu.pipeline_mode<synchronous>, transform_indices = @transform_2, window_bounds = array<i64: 32, 32>}, {pipeline_mode = #tpu.pipeline_mode<synchronous>, transform_indices = @transform_3, window_bounds = array<i64: 32, 32>}, {transform_indices = @transform_4, window_bounds = array<i64: 2, 8, 32>}]} {
    %c0 = arith.constant 0 : index
    %c0_0 = arith.constant 0 : index
    %0 = vector.load %arg2[%c0, %c0_0] : memref<32x32xf32, #tpu.memory_space<vmem>>, vector<32x32xf32>
    %c0_1 = arith.constant 0 : index
    %c0_2 = arith.constant 0 : index
    %1 = vector.load %arg3[%c0_1, %c0_2] : memref<32x32xf32, #tpu.memory_space<vmem>>, vector<32x32xf32>
    %c0_3 = arith.constant 0 : index
    %c0_4 = arith.constant 0 : index
    %2 = vector.load %arg4[%c0_3, %c0_4] : memref<32x32xf32, #tpu.memory_space<vmem>>, vector<32x32xf32>
    %c0_5 = arith.constant 0 : index
    %c0_6 = arith.constant 0 : index
    %c0_7 = arith.constant 0 : index
    %3 = vector.load %arg1[%c0_5, %c0_6, %c0_7] : memref<2x8x32xf32, #tpu.memory_space<vmem>>, vector<1x8x32xf32>
    %4 = vector.shape_cast %3 : vector<1x8x32xf32> to vector<8x32xf32>
    %cst = arith.constant dense<0.000000e+00> : vector<8x32xf32>
    %5 = tpu.matmul %4, %0, %cst {dimension_numbers = #tpu.dot_dimension_numbers<[1], [0], [0], [1], [0, 0, 1, 1], [], []>} : vector<8x32xf32>, vector<32x32xf32>, vector<8x32xf32> -> vector<8x32xf32>
    %cst_8 = arith.constant dense<0.000000e+00> : vector<8x32xf32>
    %6 = tpu.matmul %4, %1, %cst_8 {dimension_numbers = #tpu.dot_dimension_numbers<[1], [0], [0], [1], [0, 0, 1, 1], [], []>} : vector<8x32xf32>, vector<32x32xf32>, vector<8x32xf32> -> vector<8x32xf32>
    %cst_9 = arith.constant dense<0.000000e+00> : vector<8x32xf32>
    %7 = tpu.matmul %4, %2, %cst_9 {dimension_numbers = #tpu.dot_dimension_numbers<[1], [0], [0], [1], [0, 0, 1, 1], [], []>} : vector<8x32xf32>, vector<32x32xf32>, vector<8x32xf32> -> vector<8x32xf32>
    %cst_10 = arith.constant dense<0.000000e+00> : vector<8x8xf32>
    %8 = tpu.matmul %5, %6, %cst_10 {dimension_numbers = #tpu.dot_dimension_numbers<[1], [1], [0], [0], [0, 0, 1, 0], [], []>} : vector<8x32xf32>, vector<8x32xf32>, vector<8x8xf32> -> vector<8x8xf32>
    %cst_11 = arith.constant dense<0xFF800000> : vector<8xf32>
    %9 = vector.multi_reduction <maximumf>, %8, %cst_11 [1] : vector<8x8xf32> to vector<8xf32>
    %10 = vector.shape_cast %9 : vector<8xf32> to vector<8x1xf32>
    %11 = vector.broadcast %10 : vector<8x1xf32> to vector<8x8xf32>
    %12 = arith.subf %8, %11 : vector<8x8xf32>
    %13 = math.exp %12 : vector<8x8xf32>
    %cst_12 = arith.constant dense<0.000000e+00> : vector<8xf32>
    %14 = vector.multi_reduction <add>, %13, %cst_12 [1] : vector<8x8xf32> to vector<8xf32>
    %15 = vector.shape_cast %14 : vector<8xf32> to vector<8x1xf32>
    %16 = tpu.reciprocal %15 {approx = true} : vector<8x1xf32> -> vector<8x1xf32>
    %17 = vector.broadcast %16 : vector<8x1xf32> to vector<8x8xf32>
    %18 = arith.mulf %13, %17 : vector<8x8xf32>
    %cst_13 = arith.constant dense<0.000000e+00> : vector<8x32xf32>
    %19 = tpu.matmul %18, %7, %cst_13 {dimension_numbers = #tpu.dot_dimension_numbers<[1], [0], [0], [1], [0, 0, 1, 1], [], []>} : vector<8x8xf32>, vector<8x32xf32>, vector<8x32xf32> -> vector<8x32xf32>
    %c0_14 = arith.constant 0 : index
    %c0_15 = arith.constant 0 : index
    %c0_16 = arith.constant 0 : index
    %20 = vector.load %arg5[%c0_14, %c0_15, %c0_16] : memref<2x8x32xf32, #tpu.memory_space<vmem>>, vector<1x8x32xf32>
    %21 = vector.shape_cast %20 : vector<1x8x32xf32> to vector<8x32xf32>
    %22 = vector.shape_cast %19 : vector<8x32xf32> to vector<1x8x32xf32>
    tpu.vector_store %arg5[%c0_14, %c0_15, %c0_16], %22 {strides = array<i32>} : memref<2x8x32xf32, #tpu.memory_space<vmem>>, vector<1x8x32xf32>,
    %c1 = arith.constant 1 : index
    %c0_17 = arith.constant 0 : index
    %c0_18 = arith.constant 0 : index
    %23 = vector.load %arg1[%c1, %c0_17, %c0_18] : memref<2x8x32xf32, #tpu.memory_space<vmem>>, vector<1x8x32xf32>
    %24 = vector.shape_cast %23 : vector<1x8x32xf32> to vector<8x32xf32>
    %cst_19 = arith.constant dense<0.000000e+00> : vector<8x32xf32>
    %25 = tpu.matmul %24, %0, %cst_19 {dimension_numbers = #tpu.dot_dimension_numbers<[1], [0], [0], [1], [0, 0, 1, 1], [], []>} : vector<8x32xf32>, vector<32x32xf32>, vector<8x32xf32> -> vector<8x32xf32>
    %cst_20 = arith.constant dense<0.000000e+00> : vector<8x32xf32>
    %26 = tpu.matmul %24, %1, %cst_20 {dimension_numbers = #tpu.dot_dimension_numbers<[1], [0], [0], [1], [0, 0, 1, 1], [], []>} : vector<8x32xf32>, vector<32x32xf32>, vector<8x32xf32> -> vector<8x32xf32>
    %cst_21 = arith.constant dense<0.000000e+00> : vector<8x32xf32>
    %27 = tpu.matmul %24, %2, %cst_21 {dimension_numbers = #tpu.dot_dimension_numbers<[1], [0], [0], [1], [0, 0, 1, 1], [], []>} : vector<8x32xf32>, vector<32x32xf32>, vector<8x32xf32> -> vector<8x32xf32>
    %cst_22 = arith.constant dense<0.000000e+00> : vector<8x8xf32>
    %28 = tpu.matmul %25, %26, %cst_22 {dimension_numbers = #tpu.dot_dimension_numbers<[1], [1], [0], [0], [0, 0, 1, 0], [], []>} : vector<8x32xf32>, vector<8x32xf32>, vector<8x8xf32> -> vector<8x8xf32>
    %cst_23 = arith.constant dense<0xFF800000> : vector<8xf32>
    %29 = vector.multi_reduction <maximumf>, %28, %cst_23 [1] : vector<8x8xf32> to vector<8xf32>
    %30 = vector.shape_cast %29 : vector<8xf32> to vector<8x1xf32>
    %31 = vector.broadcast %30 : vector<8x1xf32> to vector<8x8xf32>
    %32 = arith.subf %28, %31 : vector<8x8xf32>
    %33 = math.exp %32 : vector<8x8xf32>
    %cst_24 = arith.constant dense<0.000000e+00> : vector<8xf32>
    %34 = vector.multi_reduction <add>, %33, %cst_24 [1] : vector<8x8xf32> to vector<8xf32>
    %35 = vector.shape_cast %34 : vector<8xf32> to vector<8x1xf32>
    %36 = tpu.reciprocal %35 {approx = true} : vector<8x1xf32> -> vector<8x1xf32>
    %37 = vector.broadcast %36 : vector<8x1xf32> to vector<8x8xf32>
    %38 = arith.mulf %33, %37 : vector<8x8xf32>
    %cst_25 = arith.constant dense<0.000000e+00> : vector<8x32xf32>
    %39 = tpu.matmul %38, %27, %cst_25 {dimension_numbers = #tpu.dot_dimension_numbers<[1], [0], [0], [1], [0, 0, 1, 1], [], []>} : vector<8x8xf32>, vector<8x32xf32>, vector<8x32xf32> -> vector<8x32xf32>
    %c1_26 = arith.constant 1 : index
    %c0_27 = arith.constant 0 : index
    %c0_28 = arith.constant 0 : index
    %40 = vector.load %arg5[%c1_26, %c0_27, %c0_28] : memref<2x8x32xf32, #tpu.memory_space<vmem>>, vector<1x8x32xf32>
    %41 = vector.shape_cast %40 : vector<1x8x32xf32> to vector<8x32xf32>
    %42 = vector.shape_cast %39 : vector<8x32xf32> to vector<1x8x32xf32>
    tpu.vector_store %arg5[%c1_26, %c0_27, %c0_28], %42 {strides = array<i32>} : memref<2x8x32xf32, #tpu.memory_space<vmem>>, vector<1x8x32xf32>,
    return
  }
  func.func @transform_0(%arg0: i32) -> (i32, i32, i32) {
    %c0_i32 = arith.constant 0 : i32
    %c0_i32_0 = arith.constant 0 : i32
    %c0_i32_1 = arith.constant 0 : i32
    return %arg0, %c0_i32, %c0_i32_0 : i32, i32, i32
  }
  func.func @transform_1(%arg0: i32) -> (i32, i32) {
    %c0_i32 = arith.constant 0 : i32
    %c0_i32_0 = arith.constant 0 : i32
    %c0_i32_1 = arith.constant 0 : i32
    return %c0_i32, %c0_i32_0 : i32, i32
  }
  func.func @transform_2(%arg0: i32) -> (i32, i32) {
    %c0_i32 = arith.constant 0 : i32
    %c0_i32_0 = arith.constant 0 : i32
    %c0_i32_1 = arith.constant 0 : i32
    return %c0_i32, %c0_i32_0 : i32, i32
  }
  func.func @transform_3(%arg0: i32) -> (i32, i32) {
    %c0_i32 = arith.constant 0 : i32
    %c0_i32_0 = arith.constant 0 : i32
    %c0_i32_1 = arith.constant 0 : i32
    return %c0_i32, %c0_i32_0 : i32, i32
  }
  func.func @transform_4(%arg0: i32) -> (i32, i32, i32) {
    %c0_i32 = arith.constant 0 : i32
    %c0_i32_0 = arith.constant 0 : i32
    %c0_i32_1 = arith.constant 0 : i32
    return %arg0, %c0_i32, %c0_i32_0 : i32, i32, i32
  }
}

</mosaic_0001>

<llo_original>
// kernel: attention_head.1
$region0: #{attention_head.1}
  #allocation0 [shape = 'u32[]', space=smem, size = 0x4, offset = 0x4, fixed_abs, tag = 'smem constant byte address 0x4 - core index']
  #allocation1 [shape = 'u32[144,128]{1,0:T(1,128)}', space=vmem, size = 0x12000, scoped, tag = 'internal scratch']
  %s0 = inlined_call_operand.hbm [shape: f32[2,8,32], index: 0, kind: input, shape index: {}]
  %s1 = inlined_call_operand.hbm [shape: f32[32,32], index: 1, kind: input, shape index: {}]
  %s2 = inlined_call_operand.hbm [shape: f32[32,32], index: 2, kind: input, shape index: {}]
  %s3 = inlined_call_operand.hbm [shape: f32[32,32], index: 3, kind: input, shape index: {}]
  %s4 = inlined_call_operand.hbm [shape: f32[2,8,32], index: 4, kind: output, shape index: {}]
  %s5 = sld [smem:[#allocation0]]
  $region42: #{attention_head.1} parent=0
    _
  %s7 = ssub.s32 1, %s5
  %s8 = scalar_select 0, %s7, %s5
  $region1: #{attention_head.1} parent=0
    #allocation2 [shape = 'u8[8192]{0}', space=vmem, size = 0x2000, scoped, tag = 'input window, operand 0, single buffered']
    #allocation3 [shape = 's32[1]{0}', space=sflag, size = 0x4, scoped, tag = 'scoped memory for attention_head.1']
    #allocation4 [shape = 's32[1]{0}', space=sflag, size = 0x4, scoped, tag = 'scoped memory for attention_head.1']
    #allocation5 [shape = 'u8[16384]{0}', space=vmem, size = 0x4000, scoped, tag = 'input window, operand 1, single buffered']
    #allocation6 [shape = 's32[1]{0}', space=sflag, size = 0x4, scoped, tag = 'scoped memory for attention_head.1']
    #allocation7 [shape = 'u8[16384]{0}', space=vmem, size = 0x4000, scoped, tag = 'input window, operand 2, single buffered']
    #allocation8 [shape = 'u8[16384]{0}', space=vmem, size = 0x4000, scoped, tag = 'input window, operand 3, single buffered']
    #allocation9 [shape = 's32[1]{0}', space=sflag, size = 0x4, scoped, tag = 'scoped memory for attention_head.1']
    #allocation10 [shape = 'u8[8192]{0}', space=vmem, size = 0x2000, scoped, tag = 'output window, operand 0, single buffered']
    %9 = vsyncpa [#allocation3], 0
    %10 = vsyncpa [#allocation6], 0
    %11 = vsyncpa [#allocation9], 0
    %12 = vsyncpa [#allocation4], 0
    // Predicated region
    $region2: #{attention_head.1} parent=1 // pred_check
      _
    $region3: #{attention_head.1} parent=1 // pred_check_branch
      %14 = sbr.rel (0) target = $region5
    $region4: #{attention_head.1} parent=1 // pred_region
      %s16 = ssub.s32 256, 256
      %17 = vsyncadd [#allocation3], %s16
      %s18 = sshll.u32 [#allocation2], 4
      %s19 = int_to_ptr.vmem [resolvable:$true] %s18
      %24 = dma.hbm_to_vmem [thread:$0]  %s0, 256, %s19, [#allocation3], 128, 128, 8
    $region5: #{attention_head.1} parent=1 // pred_fallthru
      _
    // Predicated region
    $region6: #{attention_head.1} parent=1 // pred_check
      _
    $region7: #{attention_head.1} parent=1 // pred_check_branch
      %26 = sbr.rel (0) target = $region9
    $region8: #{attention_head.1} parent=1 // pred_region
      %s28 = ssub.s32 512, 512
      %29 = vsyncadd [#allocation6], %s28
      %s30 = sshll.u32 [#allocation5], 4
      %s31 = int_to_ptr.vmem [resolvable:$true] %s30
      %36 = dma.hbm_to_vmem [thread:$0]  %s1, 512, %s31, [#allocation6], 128, 128, 8
    $region9: #{attention_head.1} parent=1 // pred_fallthru
      _
    // Predicated region
    $region10: #{attention_head.1} parent=1 // pred_check
      _
    $region11: #{attention_head.1} parent=1 // pred_check_branch
      %38 = sbr.rel (0) target = $region13
    $region12: #{attention_head.1} parent=1 // pred_region
      %s40 = ssub.s32 512, 512
      %41 = vsyncadd [#allocation6], %s40
      %s42 = sshll.u32 [#allocation7], 4
      %s43 = int_to_ptr.vmem [resolvable:$true] %s42
      %48 = dma.hbm_to_vmem [thread:$0]  %s2, 512, %s43, [#allocation6], 128, 128, 8
    $region13: #{attention_head.1} parent=1 // pred_fallthru
      _
    // Predicated region
    $region14: #{attention_head.1} parent=1 // pred_check
      _
    $region15: #{attention_head.1} parent=1 // pred_check_branch
      %50 = sbr.rel (0) target = $region17
    $region16: #{attention_head.1} parent=1 // pred_region
      %s52 = ssub.s32 512, 512
      %53 = vsyncadd [#allocation9], %s52
      %s54 = sshll.u32 [#allocation8], 4
      %s55 = int_to_ptr.vmem [resolvable:$true] %s54
      %60 = dma.hbm_to_vmem [thread:$0]  %s3, 512, %s55, [#allocation9], 128, 128, 8
    $region17: #{attention_head.1} parent=1 // pred_fallthru
      _
    // Predicated region
    $region18: #{attention_head.1} parent=1 // pred_check
      _
    $region19: #{attention_head.1} parent=1 // pred_check_branch
      %62 = sbr.rel (0) target = $region21
    $region20: #{attention_head.1} parent=1 // pred_region
      %63 = dma.done [#allocation3], 256
    $region21: #{attention_head.1} parent=1 // pred_fallthru
      _
    // Predicated region
    $region22: #{attention_head.1} parent=1 // pred_check
      _
    $region23: #{attention_head.1} parent=1 // pred_check_branch
      %65 = sbr.rel (0) target = $region25
    $region24: #{attention_head.1} parent=1 // pred_region
      %66 = dma.done [#allocation6], 512
    $region25: #{attention_head.1} parent=1 // pred_fallthru
      _
    // Predicated region
    $region26: #{attention_head.1} parent=1 // pred_check
      _
    $region27: #{attention_head.1} parent=1 // pred_check_branch
      %68 = sbr.rel (0) target = $region29
    $region28: #{attention_head.1} parent=1 // pred_region
      %69 = dma.done [#allocation6], 512
    $region29: #{attention_head.1} parent=1 // pred_fallthru
      _
    // Predicated region
    $region30: #{attention_head.1} parent=1 // pred_check
      _
    $region31: #{attention_head.1} parent=1 // pred_check_branch
      %71 = sbr.rel (0) target = $region33
    $region32: #{attention_head.1} parent=1 // pred_region
      %72 = dma.done [#allocation9], 512
    $region33: #{attention_head.1} parent=1 // pred_fallthru
      _
    %v73 = vld [vmem:[#allocation5] sm:$0xff]
    %v74 = vld [vmem:[#allocation5 + $0x8] sm:$0xff]
    %v75 = vld [vmem:[#allocation5 + $0x10] sm:$0xff]
    %v76 = vld [vmem:[#allocation5 + $0x18] sm:$0xff]
    %v77 = vld [vmem:[#allocation7] sm:$0xff]
    %v78 = vld [vmem:[#allocation7 + $0x8] sm:$0xff]
    %v79 = vld [vmem:[#allocation7 + $0x10] sm:$0xff]
    %v80 = vld [vmem:[#allocation7 + $0x18] sm:$0xff]
    %v81 = vld [vmem:[#allocation8] sm:$0xff]
    %v82 = vld [vmem:[#allocation8 + $0x8] sm:$0xff]
    %v83 = vld [vmem:[#allocation8 + $0x10] sm:$0xff]
    %v84 = vld [vmem:[#allocation8 + $0x18] sm:$0xff]
    %v85 = vld [vmem:[#allocation2] sm:$0xff]
    %vm86 = vcmask 261120
    %v88 = vsel %vm86, %v85, 0
    %90 = vmatprep.subr.mxu0 0.0
    %91 = vmatpush1.msra.mxu0 %v73
    %92 = vmatprep.subr.mxu0 0.0
    %93 = vmatpush1.msra.mxu0 %v74
    %94 = vmatprep.subr.mxu0 0.0
    %95 = vmatpush1.msra.mxu0 %v75
    %96 = vmatprep.subr.mxu0 0.0
    %97 = vmatpush1.msra.mxu0 %v76
    %98 = vmatprep.subr.mxu0 0.0
    %99 = vmatpush1.msra.mxu0 0.0
    %100 = vmatprep.subr.mxu0 0.0
    %101 = vmatpush1.msra.mxu0 0.0
    %102 = vmatprep.subr.mxu0 0.0
    %103 = vmatpush1.msra.mxu0 0.0
    %104 = vmatprep.subr.mxu0 0.0
    %105 = vmatpush1.msra.mxu0 0.0
    %106 = vmatprep.subr.mxu0 0.0
    %107 = vmatpush1.msra.mxu0 0.0
    %108 = vmatprep.subr.mxu0 0.0
    %109 = vmatpush1.msra.mxu0 0.0
    %110 = vmatprep.subr.mxu0 0.0
    %111 = vmatpush1.msra.mxu0 0.0
    %112 = vmatprep.subr.mxu0 0.0
    %113 = vmatpush1.msra.mxu0 0.0
    %114 = vmatprep.subr.mxu0 0.0
    %115 = vmatpush1.msra.mxu0 0.0
    %116 = vmatprep.subr.mxu0 0.0
    %117 = vmatpush1.msra.mxu0 0.0
    %118 = vmatprep.subr.mxu0 0.0
    %119 = vmatpush1.msra.mxu0 0.0
    %120 = vmatprep.subr.mxu0 0.0
    %121 = vmatpush1.msra.mxu0 0.0
    %122 = vmatprep.subr.mxu0 0.0
    %123 = vmatpush1.msra.mxu0 0.0
    %124 = vmatprep.subr.mxu0 0.0
    %125 = vmatpush1.msra.mxu0 0.0
    %126 = vmatprep.subr.mxu0 0.0
    %127 = vmatpush1.msra.mxu0 0.0
    %128 = vmatprep.subr.mxu0 0.0
    %129 = vmatpush1.msra.mxu0 0.0
    %130 = vmatprep.subr.mxu0 0.0
    %131 = vmatpush1.msra.mxu0 0.0
    %132 = vmatprep.subr.mxu0 0.0
    %133 = vmatpush1.msra.mxu0 0.0
    %134 = vmatprep.subr.mxu0 0.0
    %135 = vmatpush1.msra.mxu0 0.0
    %136 = vmatprep.subr.mxu0 0.0
    %137 = vmatpush1.msra.mxu0 0.0
    %138 = vmatprep.subr.mxu0 0.0
    %139 = vmatpush1.msra.mxu0 0.0
    %140 = vmatprep.subr.mxu0 0.0
    %141 = vmatpush1.msra.mxu0 0.0
    %142 = vmatprep.subr.mxu0 0.0
    %143 = vmatpush1.msra.mxu0 0.0
    %144 = vmatprep.subr.mxu0 0.0
    %145 = vmatpush1.msra.mxu0 0.0
    %146 = vmatprep.subr.mxu0 0.0
    %147 = vmatpush1.msra.mxu0 0.0
    %148 = vmatprep.subr.mxu0 0.0
    %149 = vmatpush1.msra.mxu0 0.0
    %150 = vmatprep.subr.mxu0 0.0
    %151 = vmatpush1.msra.mxu0 0.0
    %152 = vmatprep.subr.mxu0 0.0
    %153 = vmatpush1.msra.mxu0 0.0
    %154 = vmatprep.mubr.f32.mxu0 0.0
    %155 = vmatmul.mubr.f32.gmra.mrb[0].mxu0 %v88
    %v156 = vpop.f32.mrb[0].mxu0
    %v157 = vadd.f32 0.0, %v156
    %v158 = vpop.f32.mrb[0].mxu0
    %159 = vdwg.mxu0
    %160 = vmatprep.subr.mxu0 0.0
    %161 = vmatpush1.msra.mxu0 %v77
    %162 = vmatprep.subr.mxu0 0.0
    %163 = vmatpush1.msra.mxu0 %v78
    %164 = vmatprep.subr.mxu0 0.0
    %165 = vmatpush1.msra.mxu0 %v79
    %166 = vmatprep.subr.mxu0 0.0
    %167 = vmatpush1.msra.mxu0 %v80
    %168 = vmatprep.subr.mxu0 0.0
    %169 = vmatpush1.msra.mxu0 0.0
    %170 = vmatprep.subr.mxu0 0.0
    %171 = vmatpush1.msra.mxu0 0.0
    %172 = vmatprep.subr.mxu0 0.0
    %173 = vmatpush1.msra.mxu0 0.0
    %174 = vmatprep.subr.mxu0 0.0
    %175 = vmatpush1.msra.mxu0 0.0
    %176 = vmatprep.subr.mxu0 0.0
    %177 = vmatpush1.msra.mxu0 0.0
    %178 = vmatprep.subr.mxu0 0.0
    %179 = vmatpush1.msra.mxu0 0.0
    %180 = vmatprep.subr.mxu0 0.0
    %181 = vmatpush1.msra.mxu0 0.0
    %182 = vmatprep.subr.mxu0 0.0
    %183 = vmatpush1.msra.mxu0 0.0
    %184 = vmatprep.subr.mxu0 0.0
    %185 = vmatpush1.msra.mxu0 0.0
    %186 = vmatprep.subr.mxu0 0.0
    %187 = vmatpush1.msra.mxu0 0.0
    %188 = vmatprep.subr.mxu0 0.0
    %189 = vmatpush1.msra.mxu0 0.0
    %190 = vmatprep.subr.mxu0 0.0
    %191 = vmatpush1.msra.mxu0 0.0
    %192 = vmatprep.subr.mxu0 0.0
    %193 = vmatpush1.msra.mxu0 0.0
    %194 = vmatprep.subr.mxu0 0.0
    %195 = vmatpush1.msra.mxu0 0.0
    %196 = vmatprep.subr.mxu0 0.0
    %197 = vmatpush1.msra.mxu0 0.0
    %198 = vmatprep.subr.mxu0 0.0
    %199 = vmatpush1.msra.mxu0 0.0
    %200 = vmatprep.subr.mxu0 0.0
    %201 = vmatpush1.msra.mxu0 0.0
    %202 = vmatprep.subr.mxu0 0.0
    %203 = vmatpush1.msra.mxu0 0.0
    %204 = vmatprep.subr.mxu0 0.0
    %205 = vmatpush1.msra.mxu0 0.0
    %206 = vmatprep.subr.mxu0 0.0
    %207 = vmatpush1.msra.mxu0 0.0
    %208 = vmatprep.subr.mxu0 0.0
    %209 = vmatpush1.msra.mxu0 0.0
    %210 = vmatprep.subr.mxu0 0.0
    %211 = vmatpush1.msra.mxu0 0.0
    %212 = vmatprep.subr.mxu0 0.0
    %213 = vmatpush1.msra.mxu0 0.0
    %214 = vmatprep.subr.mxu0 0.0
    %215 = vmatpush1.msra.mxu0 0.0
    %216 = vmatprep.subr.mxu0 0.0
    %217 = vmatpush1.msra.mxu0 0.0
    %218 = vmatprep.subr.mxu0 0.0
    %219 = vmatpush1.msra.mxu0 0.0
    %220 = vmatprep.subr.mxu0 0.0
    %221 = vmatpush1.msra.mxu0 0.0
    %222 = vmatprep.subr.mxu0 0.0
    %223 = vmatpush1.msra.mxu0 0.0
    %224 = vmatprep.mubr.f32.mxu0 0.0
    %225 = vmatmul.mubr.f32.gmra.mrb[0].mxu0 %v88
    %v226 = vpop.f32.mrb[0].mxu0
    %v227 = vadd.f32 0.0, %v226
    %v228 = vpop.f32.mrb[0].mxu0
    %229 = vdwg.mxu0
    %230 = vmatprep.subr.mxu0 0.0
    %231 = vmatpush1.msra.mxu0 %v81
    %232 = vmatprep.subr.mxu0 0.0
    %233 = vmatpush1.msra.mxu0 %v82
    %234 = vmatprep.subr.mxu0 0.0
    %235 = vmatpush1.msra.mxu0 %v83
    %236 = vmatprep.subr.mxu0 0.0
    %237 = vmatpush1.msra.mxu0 %v84
    %238 = vmatprep.subr.mxu0 0.0
    %239 = vmatpush1.msra.mxu0 0.0
    %240 = vmatprep.subr.mxu0 0.0
    %241 = vmatpush1.msra.mxu0 0.0
    %242 = vmatprep.subr.mxu0 0.0
    %243 = vmatpush1.msra.mxu0 0.0
    %244 = vmatprep.subr.mxu0 0.0
    %245 = vmatpush1.msra.mxu0 0.0
    %246 = vmatprep.subr.mxu0 0.0
    %247 = vmatpush1.msra.mxu0 0.0
    %248 = vmatprep.subr.mxu0 0.0
    %249 = vmatpush1.msra.mxu0 0.0
    %250 = vmatprep.subr.mxu0 0.0
    %251 = vmatpush1.msra.mxu0 0.0
    %252 = vmatprep.subr.mxu0 0.0
    %253 = vmatpush1.msra.mxu0 0.0
    %254 = vmatprep.subr.mxu0 0.0
    %255 = vmatpush1.msra.mxu0 0.0
    %256 = vmatprep.subr.mxu0 0.0
    %257 = vmatpush1.msra.mxu0 0.0
    %258 = vmatprep.subr.mxu0 0.0
    %259 = vmatpush1.msra.mxu0 0.0
    %260 = vmatprep.subr.mxu0 0.0
    %261 = vmatpush1.msra.mxu0 0.0
    %262 = vmatprep.subr.mxu0 0.0
    %263 = vmatpush1.msra.mxu0 0.0
    %264 = vmatprep.subr.mxu0 0.0
    %265 = vmatpush1.msra.mxu0 0.0
    %266 = vmatprep.subr.mxu0 0.0
    %267 = vmatpush1.msra.mxu0 0.0
    %268 = vmatprep.subr.mxu0 0.0
    %269 = vmatpush1.msra.mxu0 0.0
    %270 = vmatprep.subr.mxu0 0.0
    %271 = vmatpush1.msra.mxu0 0.0
    %272 = vmatprep.subr.mxu0 0.0
    %273 = vmatpush1.msra.mxu0 0.0
    %274 = vmatprep.subr.mxu0 0.0
    %275 = vmatpush1.msra.mxu0 0.0
    %276 = vmatprep.subr.mxu0 0.0
    %277 = vmatpush1.msra.mxu0 0.0
    %278 = vmatprep.subr.mxu0 0.0
    %279 = vmatpush1.msra.mxu0 0.0
    %280 = vmatprep.subr.mxu0 0.0
    %281 = vmatpush1.msra.mxu0 0.0
    %282 = vmatprep.subr.mxu0 0.0
    %283 = vmatpush1.msra.mxu0 0.0
    %284 = vmatprep.subr.mxu0 0.0
    %285 = vmatpush1.msra.mxu0 0.0
    %286 = vmatprep.subr.mxu0 0.0
    %287 = vmatpush1.msra.mxu0 0.0
    %288 = vmatprep.subr.mxu0 0.0
    %289 = vmatpush1.msra.mxu0 0.0
    %290 = vmatprep.subr.mxu0 0.0
    %291 = vmatpush1.msra.mxu0 0.0
    %292 = vmatprep.subr.mxu0 0.0
    %293 = vmatpush1.msra.mxu0 0.0
    %294 = vmatprep.mubr.f32.mxu0 0.0
    %295 = vmatmul.mubr.f32.gmra.mrb[0].mxu0 %v88
    %v296 = vpop.f32.mrb[0].mxu0
    %v297 = vadd.f32 0.0, %v296
    %v298 = vpop.f32.mrb[0].mxu0
    %299 = vdwg.mxu0
    %v301 = vsel %vm86, %v157, 0
    %v304 = vsel %vm86, %v227, 0
    %306 = vmatprep.subr.mxu0 0.0
    %307 = vmatpush1.xpose.msra.mxu0 %v304
    %308 = vmatprep.subr.mxu0 0.0
    %309 = vmatpush1.xpose.msra.mxu0 0.0
    %310 = vmatprep.subr.mxu0 0.0
    %311 = vmatpush1.xpose.msra.mxu0 0.0
    %312 = vmatprep.subr.mxu0 0.0
    %313 = vmatpush1.xpose.msra.mxu0 0.0
    %314 = vmatprep.subr.mxu0 0.0
    %315 = vmatpush1.xpose.msra.mxu0 0.0
    %316 = vmatprep.subr.mxu0 0.0
    %317 = vmatpush1.xpose.msra.mxu0 0.0
    %318 = vmatprep.subr.mxu0 0.0
    %319 = vmatpush1.xpose.msra.mxu0 0.0
    %320 = vmatprep.subr.mxu0 0.0
    %321 = vmatpush1.xpose.msra.mxu0 0.0
    %322 = vmatprep.subr.mxu0 0.0
    %323 = vmatpush1.xpose.msra.mxu0 0.0
    %324 = vmatprep.subr.mxu0 0.0
    %325 = vmatpush1.xpose.msra.mxu0 0.0
    %326 = vmatprep.subr.mxu0 0.0
    %327 = vmatpush1.xpose.msra.mxu0 0.0
    %328 = vmatprep.subr.mxu0 0.0
    %329 = vmatpush1.xpose.msra.mxu0 0.0
    %330 = vmatprep.subr.mxu0 0.0
    %331 = vmatpush1.xpose.msra.mxu0 0.0
    %332 = vmatprep.subr.mxu0 0.0
    %333 = vmatpush1.xpose.msra.mxu0 0.0
    %334 = vmatprep.subr.mxu0 0.0
    %335 = vmatpush1.xpose.msra.mxu0 0.0
    %336 = vmatprep.subr.mxu0 0.0
    %337 = vmatpush1.xpose.msra.mxu0 0.0
    %338 = vmatprep.subr.mxu0 0.0
    %339 = vmatpush1.xpose.msra.mxu0 0.0
    %340 = vmatprep.subr.mxu0 0.0
    %341 = vmatpush1.xpose.msra.mxu0 0.0
    %342 = vmatprep.subr.mxu0 0.0
    %343 = vmatpush1.xpose.msra.mxu0 0.0
    %344 = vmatprep.subr.mxu0 0.0
    %345 = vmatpush1.xpose.msra.mxu0 0.0
    %346 = vmatprep.subr.mxu0 0.0
    %347 = vmatpush1.xpose.msra.mxu0 0.0
    %348 = vmatprep.subr.mxu0 0.0
    %349 = vmatpush1.xpose.msra.mxu0 0.0
    %350 = vmatprep.subr.mxu0 0.0
    %351 = vmatpush1.xpose.msra.mxu0 0.0
    %352 = vmatprep.subr.mxu0 0.0
    %353 = vmatpush1.xpose.msra.mxu0 0.0
    %354 = vmatprep.subr.mxu0 0.0
    %355 = vmatpush1.xpose.msra.mxu0 0.0
    %356 = vmatprep.subr.mxu0 0.0
    %357 = vmatpush1.xpose.msra.mxu0 0.0
    %358 = vmatprep.subr.mxu0 0.0
    %359 = vmatpush1.xpose.msra.mxu0 0.0
    %360 = vmatprep.subr.mxu0 0.0
    %361 = vmatpush1.xpose.msra.mxu0 0.0
    %362 = vmatprep.subr.mxu0 0.0
    %363 = vmatpush1.xpose.msra.mxu0 0.0
    %364 = vmatprep.subr.mxu0 0.0
    %365 = vmatpush1.xpose.msra.mxu0 0.0
    %366 = vmatprep.subr.mxu0 0.0
    %367 = vmatpush1.xpose.msra.mxu0 0.0
    %368 = vmatprep.subr.mxu0 0.0
    %369 = vmatpush1.xpose.msra.mxu0 0.0
    %370 = vmatprep.mubr.f32.mxu0 0.0
    %371 = vmatmul.mubr.f32.gmra.mrb[0].mxu0 %v301
    %v372 = vpop.f32.mrb[0].mxu0
    %v373 = vadd.f32 0.0, %v372
    %v374 = vpop.f32.mrb[0].mxu0
    %375 = vdwg.mxu0
    %vm376 = vcmask 64512
    %v377 = vsel %vm376, %v373, -inf
    %378 = vmax.xlane.f32.xlu0 %v377
    %v379 = vpop.xlane.xlu0 %378
    %v380 = vsub.f32 %v373, %v379
    %v381 = vmul.f32 %v380, 1.442695
    %v382 = vpow.pop %v381
    %v383 = vsel %vm376, %v382, 0.0
    %384 = vadd.xlane.f32.xlu0 %v383
    %v385 = vpop.xlane.xlu0 %384
    %v386 = vrcp.pop %v385
    %v387 = vmul.f32 %v382, %v386
    %v389 = vsel %vm376, %v387, 0
    %391 = vmatprep.subr.mxu0 0.0
    %392 = vmatpush1.msra.mxu0 %v297
    %393 = vmatprep.subr.mxu0 0.0
    %394 = vmatpush1.msra.mxu0 0.0
    %395 = vmatprep.subr.mxu0 0.0
    %396 = vmatpush1.msra.mxu0 0.0
    %397 = vmatprep.subr.mxu0 0.0
    %398 = vmatpush1.msra.mxu0 0.0
    %399 = vmatprep.subr.mxu0 0.0
    %400 = vmatpush1.msra.mxu0 0.0
    %401 = vmatprep.subr.mxu0 0.0
    %402 = vmatpush1.msra.mxu0 0.0
    %403 = vmatprep.subr.mxu0 0.0
    %404 = vmatpush1.msra.mxu0 0.0
    %405 = vmatprep.subr.mxu0 0.0
    %406 = vmatpush1.msra.mxu0 0.0
    %407 = vmatprep.subr.mxu0 0.0
    %408 = vmatpush1.msra.mxu0 0.0
    %409 = vmatprep.subr.mxu0 0.0
    %410 = vmatpush1.msra.mxu0 0.0
    %411 = vmatprep.subr.mxu0 0.0
    %412 = vmatpush1.msra.mxu0 0.0
    %413 = vmatprep.subr.mxu0 0.0
    %414 = vmatpush1.msra.mxu0 0.0
    %415 = vmatprep.subr.mxu0 0.0
    %416 = vmatpush1.msra.mxu0 0.0
    %417 = vmatprep.subr.mxu0 0.0
    %418 = vmatpush1.msra.mxu0 0.0
    %419 = vmatprep.subr.mxu0 0.0
    %420 = vmatpush1.msra.mxu0 0.0
    %421 = vmatprep.subr.mxu0 0.0
    %422 = vmatpush1.msra.mxu0 0.0
    %423 = vmatprep.subr.mxu0 0.0
    %424 = vmatpush1.msra.mxu0 0.0
    %425 = vmatprep.subr.mxu0 0.0
    %426 = vmatpush1.msra.mxu0 0.0
    %427 = vmatprep.subr.mxu0 0.0
    %428 = vmatpush1.msra.mxu0 0.0
    %429 = vmatprep.subr.mxu0 0.0
    %430 = vmatpush1.msra.mxu0 0.0
    %431 = vmatprep.subr.mxu0 0.0
    %432 = vmatpush1.msra.mxu0 0.0
    %433 = vmatprep.subr.mxu0 0.0
    %434 = vmatpush1.msra.mxu0 0.0
    %435 = vmatprep.subr.mxu0 0.0
    %436 = vmatpush1.msra.mxu0 0.0
    %437 = vmatprep.subr.mxu0 0.0
    %438 = vmatpush1.msra.mxu0 0.0
    %439 = vmatprep.subr.mxu0 0.0
    %440 = vmatpush1.msra.mxu0 0.0
    %441 = vmatprep.subr.mxu0 0.0
    %442 = vmatpush1.msra.mxu0 0.0
    %443 = vmatprep.subr.mxu0 0.0
    %444 = vmatpush1.msra.mxu0 0.0
    %445 = vmatprep.subr.mxu0 0.0
    %446 = vmatpush1.msra.mxu0 0.0
    %447 = vmatprep.subr.mxu0 0.0
    %448 = vmatpush1.msra.mxu0 0.0
    %449 = vmatprep.subr.mxu0 0.0
    %450 = vmatpush1.msra.mxu0 0.0
    %451 = vmatprep.subr.mxu0 0.0
    %452 = vmatpush1.msra.mxu0 0.0
    %453 = vmatprep.subr.mxu0 0.0
    %454 = vmatpush1.msra.mxu0 0.0
    %455 = vmatprep.mubr.f32.mxu0 0.0
    %456 = vmatmul.mubr.f32.gmra.mrb[0].mxu0 %v389
    %v457 = vpop.f32.mrb[0].mxu0
    %v458 = vadd.f32 0.0, %v457
    %v459 = vpop.f32.mrb[0].mxu0
    %460 = vdwg.mxu0
    %461 = vst.msk [vmem:[#allocation10] sm:$0xff] %vm86, %v458
    %s462 = scalar_lea.vmem [#allocation2], 8
    %v463 = vld [vmem:[%s462] sm:$0xff]
    %v465 = vsel %vm86, %v463, 0
    %467 = vmatprep.subr.mxu0 0.0
    %468 = vmatpush1.msra.mxu0 %v73
    %469 = vmatprep.subr.mxu0 0.0
    %470 = vmatpush1.msra.mxu0 %v74
    %471 = vmatprep.subr.mxu0 0.0
    %472 = vmatpush1.msra.mxu0 %v75
    %473 = vmatprep.subr.mxu0 0.0
    %474 = vmatpush1.msra.mxu0 %v76
    %475 = vmatprep.subr.mxu0 0.0
    %476 = vmatpush1.msra.mxu0 0.0
    %477 = vmatprep.subr.mxu0 0.0
    %478 = vmatpush1.msra.mxu0 0.0
    %479 = vmatprep.subr.mxu0 0.0
    %480 = vmatpush1.msra.mxu0 0.0
    %481 = vmatprep.subr.mxu0 0.0
    %482 = vmatpush1.msra.mxu0 0.0
    %483 = vmatprep.subr.mxu0 0.0
    %484 = vmatpush1.msra.mxu0 0.0
    %485 = vmatprep.subr.mxu0 0.0
    %486 = vmatpush1.msra.mxu0 0.0
    %487 = vmatprep.subr.mxu0 0.0
    %488 = vmatpush1.msra.mxu0 0.0
    %489 = vmatprep.subr.mxu0 0.0
    %490 = vmatpush1.msra.mxu0 0.0
    %491 = vmatprep.subr.mxu0 0.0
    %492 = vmatpush1.msra.mxu0 0.0
    %493 = vmatprep.subr.mxu0 0.0
    %494 = vmatpush1.msra.mxu0 0.0
    %495 = vmatprep.subr.mxu0 0.0
    %496 = vmatpush1.msra.mxu0 0.0
    %497 = vmatprep.subr.mxu0 0.0
    %498 = vmatpush1.msra.mxu0 0.0
    %499 = vmatprep.subr.mxu0 0.0
    %500 = vmatpush1.msra.mxu0 0.0
    %501 = vmatprep.subr.mxu0 0.0
    %502 = vmatpush1.msra.mxu0 0.0
    %503 = vmatprep.subr.mxu0 0.0
    %504 = vmatpush1.msra.mxu0 0.0
    %505 = vmatprep.subr.mxu0 0.0
    %506 = vmatpush1.msra.mxu0 0.0
    %507 = vmatprep.subr.mxu0 0.0
    %508 = vmatpush1.msra.mxu0 0.0
    %509 = vmatprep.subr.mxu0 0.0
    %510 = vmatpush1.msra.mxu0 0.0
    %511 = vmatprep.subr.mxu0 0.0
    %512 = vmatpush1.msra.mxu0 0.0
    %513 = vmatprep.subr.mxu0 0.0
    %514 = vmatpush1.msra.mxu0 0.0
    %515 = vmatprep.subr.mxu0 0.0
    %516 = vmatpush1.msra.mxu0 0.0
    %517 = vmatprep.subr.mxu0 0.0
    %518 = vmatpush1.msra.mxu0 0.0
    %519 = vmatprep.subr.mxu0 0.0
    %520 = vmatpush1.msra.mxu0 0.0
    %521 = vmatprep.subr.mxu0 0.0
    %522 = vmatpush1.msra.mxu0 0.0
    %523 = vmatprep.subr.mxu0 0.0
    %524 = vmatpush1.msra.mxu0 0.0
    %525 = vmatprep.subr.mxu0 0.0
    %526 = vmatpush1.msra.mxu0 0.0
    %527 = vmatprep.subr.mxu0 0.0
    %528 = vmatpush1.msra.mxu0 0.0
    %529 = vmatprep.subr.mxu0 0.0
    %530 = vmatpush1.msra.mxu0 0.0
    %531 = vmatprep.mubr.f32.mxu0 0.0
    %532 = vmatmul.mubr.f32.gmra.mrb[0].mxu0 %v465
    %v533 = vpop.f32.mrb[0].mxu0
    %v534 = vadd.f32 0.0, %v533
    %v535 = vpop.f32.mrb[0].mxu0
    %536 = vdwg.mxu0
    %537 = vmatprep.subr.mxu0 0.0
    %538 = vmatpush1.msra.mxu0 %v77
    %539 = vmatprep.subr.mxu0 0.0
    %540 = vmatpush1.msra.mxu0 %v78
    %541 = vmatprep.subr.mxu0 0.0
    %542 = vmatpush1.msra.mxu0 %v79
    %543 = vmatprep.subr.mxu0 0.0
    %544 = vmatpush1.msra.mxu0 %v80
    %545 = vmatprep.subr.mxu0 0.0
    %546 = vmatpush1.msra.mxu0 0.0
    %547 = vmatprep.subr.mxu0 0.0
    %548 = vmatpush1.msra.mxu0 0.0
    %549 = vmatprep.subr.mxu0 0.0
    %550 = vmatpush1.msra.mxu0 0.0
    %551 = vmatprep.subr.mxu0 0.0
    %552 = vmatpush1.msra.mxu0 0.0
    %553 = vmatprep.subr.mxu0 0.0
    %554 = vmatpush1.msra.mxu0 0.0
    %555 = vmatprep.subr.mxu0 0.0
    %556 = vmatpush1.msra.mxu0 0.0
    %557 = vmatprep.subr.mxu0 0.0
    %558 = vmatpush1.msra.mxu0 0.0
    %559 = vmatprep.subr.mxu0 0.0
    %560 = vmatpush1.msra.mxu0 0.0
    %561 = vmatprep.subr.mxu0 0.0
    %562 = vmatpush1.msra.mxu0 0.0
    %563 = vmatprep.subr.mxu0 0.0
    %564 = vmatpush1.msra.mxu0 0.0
    %565 = vmatprep.subr.mxu0 0.0
    %566 = vmatpush1.msra.mxu0 0.0
    %567 = vmatprep.subr.mxu0 0.0
    %568 = vmatpush1.msra.mxu0 0.0
    %569 = vmatprep.subr.mxu0 0.0
    %570 = vmatpush1.msra.mxu0 0.0
    %571 = vmatprep.subr.mxu0 0.0
    %572 = vmatpush1.msra.mxu0 0.0
    %573 = vmatprep.subr.mxu0 0.0
    %574 = vmatpush1.msra.mxu0 0.0
    %575 = vmatprep.subr.mxu0 0.0
    %576 = vmatpush1.msra.mxu0 0.0
    %577 = vmatprep.subr.mxu0 0.0
    %578 = vmatpush1.msra.mxu0 0.0
    %579 = vmatprep.subr.mxu0 0.0
    %580 = vmatpush1.msra.mxu0 0.0
    %581 = vmatprep.subr.mxu0 0.0
    %582 = vmatpush1.msra.mxu0 0.0
    %583 = vmatprep.subr.mxu0 0.0
    %584 = vmatpush1.msra.mxu0 0.0
    %585 = vmatprep.subr.mxu0 0.0
    %586 = vmatpush1.msra.mxu0 0.0
    %587 = vmatprep.subr.mxu0 0.0
    %588 = vmatpush1.msra.mxu0 0.0
    %589 = vmatprep.subr.mxu0 0.0
    %590 = vmatpush1.msra.mxu0 0.0
    %591 = vmatprep.subr.mxu0 0.0
    %592 = vmatpush1.msra.mxu0 0.0
    %593 = vmatprep.subr.mxu0 0.0
    %594 = vmatpush1.msra.mxu0 0.0
    %595 = vmatprep.subr.mxu0 0.0
    %596 = vmatpush1.msra.mxu0 0.0
    %597 = vmatprep.subr.mxu0 0.0
    %598 = vmatpush1.msra.mxu0 0.0
    %599 = vmatprep.subr.mxu0 0.0
    %600 = vmatpush1.msra.mxu0 0.0
    %601 = vmatprep.mubr.f32.mxu0 0.0
    %602 = vmatmul.mubr.f32.gmra.mrb[0].mxu0 %v465
    %v603 = vpop.f32.mrb[0].mxu0
    %v604 = vadd.f32 0.0, %v603
    %v605 = vpop.f32.mrb[0].mxu0
    %606 = vdwg.mxu0
    %607 = vmatprep.subr.mxu0 0.0
    %608 = vmatpush1.msra.mxu0 %v81
    %609 = vmatprep.subr.mxu0 0.0
    %610 = vmatpush1.msra.mxu0 %v82
    %611 = vmatprep.subr.mxu0 0.0
    %612 = vmatpush1.msra.mxu0 %v83
    %613 = vmatprep.subr.mxu0 0.0
    %614 = vmatpush1.msra.mxu0 %v84
    %615 = vmatprep.subr.mxu0 0.0
    %616 = vmatpush1.msra.mxu0 0.0
    %617 = vmatprep.subr.mxu0 0.0
    %618 = vmatpush1.msra.mxu0 0.0
    %619 = vmatprep.subr.mxu0 0.0
    %620 = vmatpush1.msra.mxu0 0.0
    %621 = vmatprep.subr.mxu0 0.0
    %622 = vmatpush1.msra.mxu0 0.0
    %623 = vmatprep.subr.mxu0 0.0
    %624 = vmatpush1.msra.mxu0 0.0
    %625 = vmatprep.subr.mxu0 0.0
    %626 = vmatpush1.msra.mxu0 0.0
    %627 = vmatprep.subr.mxu0 0.0
    %628 = vmatpush1.msra.mxu0 0.0
    %629 = vmatprep.subr.mxu0 0.0
    %630 = vmatpush1.msra.mxu0 0.0
    %631 = vmatprep.subr.mxu0 0.0
    %632 = vmatpush1.msra.mxu0 0.0
    %633 = vmatprep.subr.mxu0 0.0
    %634 = vmatpush1.msra.mxu0 0.0
    %635 = vmatprep.subr.mxu0 0.0
    %636 = vmatpush1.msra.mxu0 0.0
    %637 = vmatprep.subr.mxu0 0.0
    %638 = vmatpush1.msra.mxu0 0.0
    %639 = vmatprep.subr.mxu0 0.0
    %640 = vmatpush1.msra.mxu0 0.0
    %641 = vmatprep.subr.mxu0 0.0
    %642 = vmatpush1.msra.mxu0 0.0
    %643 = vmatprep.subr.mxu0 0.0
    %644 = vmatpush1.msra.mxu0 0.0
    %645 = vmatprep.subr.mxu0 0.0
    %646 = vmatpush1.msra.mxu0 0.0
    %647 = vmatprep.subr.mxu0 0.0
    %648 = vmatpush1.msra.mxu0 0.0
    %649 = vmatprep.subr.mxu0 0.0
    %650 = vmatpush1.msra.mxu0 0.0
    %651 = vmatprep.subr.mxu0 0.0
    %652 = vmatpush1.msra.mxu0 0.0
    %653 = vmatprep.subr.mxu0 0.0
    %654 = vmatpush1.msra.mxu0 0.0
    %655 = vmatprep.subr.mxu0 0.0
    %656 = vmatpush1.msra.mxu0 0.0
    %657 = vmatprep.subr.mxu0 0.0
    %658 = vmatpush1.msra.mxu0 0.0
    %659 = vmatprep.subr.mxu0 0.0
    %660 = vmatpush1.msra.mxu0 0.0
    %661 = vmatprep.subr.mxu0 0.0
    %662 = vmatpush1.msra.mxu0 0.0
    %663 = vmatprep.subr.mxu0 0.0
    %664 = vmatpush1.msra.mxu0 0.0
    %665 = vmatprep.subr.mxu0 0.0
    %666 = vmatpush1.msra.mxu0 0.0
    %667 = vmatprep.subr.mxu0 0.0
    %668 = vmatpush1.msra.mxu0 0.0
    %669 = vmatprep.subr.mxu0 0.0
    %670 = vmatpush1.msra.mxu0 0.0
    %671 = vmatprep.mubr.f32.mxu0 0.0
    %672 = vmatmul.mubr.f32.gmra.mrb[0].mxu0 %v465
    %v673 = vpop.f32.mrb[0].mxu0
    %v674 = vadd.f32 0.0, %v673
    %v675 = vpop.f32.mrb[0].mxu0
    %676 = vdwg.mxu0
    %v678 = vsel %vm86, %v534, 0
    %v681 = vsel %vm86, %v604, 0
    %683 = vmatprep.subr.mxu0 0.0
    %684 = vmatpush1.xpose.msra.mxu0 %v681
    %685 = vmatprep.subr.mxu0 0.0
    %686 = vmatpush1.xpose.msra.mxu0 0.0
    %687 = vmatprep.subr.mxu0 0.0
    %688 = vmatpush1.xpose.msra.mxu0 0.0
    %689 = vmatprep.subr.mxu0 0.0
    %690 = vmatpush1.xpose.msra.mxu0 0.0
    %691 = vmatprep.subr.mxu0 0.0
    %692 = vmatpush1.xpose.msra.mxu0 0.0
    %693 = vmatprep.subr.mxu0 0.0
    %694 = vmatpush1.xpose.msra.mxu0 0.0
    %695 = vmatprep.subr.mxu0 0.0
    %696 = vmatpush1.xpose.msra.mxu0 0.0
    %697 = vmatprep.subr.mxu0 0.0
    %698 = vmatpush1.xpose.msra.mxu0 0.0
    %699 = vmatprep.subr.mxu0 0.0
    %700 = vmatpush1.xpose.msra.mxu0 0.0
    %701 = vmatprep.subr.mxu0 0.0
    %702 = vmatpush1.xpose.msra.mxu0 0.0
    %703 = vmatprep.subr.mxu0 0.0
    %704 = vmatpush1.xpose.msra.mxu0 0.0
    %705 = vmatprep.subr.mxu0 0.0
    %706 = vmatpush1.xpose.msra.mxu0 0.0
    %707 = vmatprep.subr.mxu0 0.0
    %708 = vmatpush1.xpose.msra.mxu0 0.0
    %709 = vmatprep.subr.mxu0 0.0
    %710 = vmatpush1.xpose.msra.mxu0 0.0
    %711 = vmatprep.subr.mxu0 0.0
    %712 = vmatpush1.xpose.msra.mxu0 0.0
    %713 = vmatprep.subr.mxu0 0.0
    %714 = vmatpush1.xpose.msra.mxu0 0.0
    %715 = vmatprep.subr.mxu0 0.0
    %716 = vmatpush1.xpose.msra.mxu0 0.0
    %717 = vmatprep.subr.mxu0 0.0
    %718 = vmatpush1.xpose.msra.mxu0 0.0
    %719 = vmatprep.subr.mxu0 0.0
    %720 = vmatpush1.xpose.msra.mxu0 0.0
    %721 = vmatprep.subr.mxu0 0.0
    %722 = vmatpush1.xpose.msra.mxu0 0.0
    %723 = vmatprep.subr.mxu0 0.0
    %724 = vmatpush1.xpose.msra.mxu0 0.0
    %725 = vmatprep.subr.mxu0 0.0
    %726 = vmatpush1.xpose.msra.mxu0 0.0
    %727 = vmatprep.subr.mxu0 0.0
    %728 = vmatpush1.xpose.msra.mxu0 0.0
    %729 = vmatprep.subr.mxu0 0.0
    %730 = vmatpush1.xpose.msra.mxu0 0.0
    %731 = vmatprep.subr.mxu0 0.0
    %732 = vmatpush1.xpose.msra.mxu0 0.0
    %733 = vmatprep.subr.mxu0 0.0
    %734 = vmatpush1.xpose.msra.mxu0 0.0
    %735 = vmatprep.subr.mxu0 0.0
    %736 = vmatpush1.xpose.msra.mxu0 0.0
    %737 = vmatprep.subr.mxu0 0.0
    %738 = vmatpush1.xpose.msra.mxu0 0.0
    %739 = vmatprep.subr.mxu0 0.0
    %740 = vmatpush1.xpose.msra.mxu0 0.0
    %741 = vmatprep.subr.mxu0 0.0
    %742 = vmatpush1.xpose.msra.mxu0 0.0
    %743 = vmatprep.subr.mxu0 0.0
    %744 = vmatpush1.xpose.msra.mxu0 0.0
    %745 = vmatprep.subr.mxu0 0.0
    %746 = vmatpush1.xpose.msra.mxu0 0.0
    %747 = vmatprep.mubr.f32.mxu0 0.0
    %748 = vmatmul.mubr.f32.gmra.mrb[0].mxu0 %v678
    %v749 = vpop.f32.mrb[0].mxu0
    %v750 = vadd.f32 0.0, %v749
    %v751 = vpop.f32.mrb[0].mxu0
    %752 = vdwg.mxu0
    %v753 = vsel %vm376, %v750, -inf
    %754 = vmax.xlane.f32.xlu0 %v753
    %v755 = vpop.xlane.xlu0 %754
    %v756 = vsub.f32 %v750, %v755
    %v757 = vmul.f32 %v756, 1.442695
    %v758 = vpow.pop %v757
    %v759 = vsel %vm376, %v758, 0.0
    %760 = vadd.xlane.f32.xlu0 %v759
    %v761 = vpop.xlane.xlu0 %760
    %v762 = vrcp.pop %v761
    %v763 = vmul.f32 %v758, %v762
    %v765 = vsel %vm376, %v763, 0
    %767 = vmatprep.subr.mxu0 0.0
    %768 = vmatpush1.msra.mxu0 %v674
    %769 = vmatprep.subr.mxu0 0.0
    %770 = vmatpush1.msra.mxu0 0.0
    %771 = vmatprep.subr.mxu0 0.0
    %772 = vmatpush1.msra.mxu0 0.0
    %773 = vmatprep.subr.mxu0 0.0
    %774 = vmatpush1.msra.mxu0 0.0
    %775 = vmatprep.subr.mxu0 0.0
    %776 = vmatpush1.msra.mxu0 0.0
    %777 = vmatprep.subr.mxu0 0.0
    %778 = vmatpush1.msra.mxu0 0.0
    %779 = vmatprep.subr.mxu0 0.0
    %780 = vmatpush1.msra.mxu0 0.0
    %781 = vmatprep.subr.mxu0 0.0
    %782 = vmatpush1.msra.mxu0 0.0
    %783 = vmatprep.subr.mxu0 0.0
    %784 = vmatpush1.msra.mxu0 0.0
    %785 = vmatprep.subr.mxu0 0.0
    %786 = vmatpush1.msra.mxu0 0.0
    %787 = vmatprep.subr.mxu0 0.0
    %788 = vmatpush1.msra.mxu0 0.0
    %789 = vmatprep.subr.mxu0 0.0
    %790 = vmatpush1.msra.mxu0 0.0
    %791 = vmatprep.subr.mxu0 0.0
    %792 = vmatpush1.msra.mxu0 0.0
    %793 = vmatprep.subr.mxu0 0.0
    %794 = vmatpush1.msra.mxu0 0.0
    %795 = vmatprep.subr.mxu0 0.0
    %796 = vmatpush1.msra.mxu0 0.0
    %797 = vmatprep.subr.mxu0 0.0
    %798 = vmatpush1.msra.mxu0 0.0
    %799 = vmatprep.subr.mxu0 0.0
    %800 = vmatpush1.msra.mxu0 0.0
    %801 = vmatprep.subr.mxu0 0.0
    %802 = vmatpush1.msra.mxu0 0.0
    %803 = vmatprep.subr.mxu0 0.0
    %804 = vmatpush1.msra.mxu0 0.0
    %805 = vmatprep.subr.mxu0 0.0
    %806 = vmatpush1.msra.mxu0 0.0
    %807 = vmatprep.subr.mxu0 0.0
    %808 = vmatpush1.msra.mxu0 0.0
    %809 = vmatprep.subr.mxu0 0.0
    %810 = vmatpush1.msra.mxu0 0.0
    %811 = vmatprep.subr.mxu0 0.0
    %812 = vmatpush1.msra.mxu0 0.0
    %813 = vmatprep.subr.mxu0 0.0
    %814 = vmatpush1.msra.mxu0 0.0
    %815 = vmatprep.subr.mxu0 0.0
    %816 = vmatpush1.msra.mxu0 0.0
    %817 = vmatprep.subr.mxu0 0.0
    %818 = vmatpush1.msra.mxu0 0.0
    %819 = vmatprep.subr.mxu0 0.0
    %820 = vmatpush1.msra.mxu0 0.0
    %821 = vmatprep.subr.mxu0 0.0
    %822 = vmatpush1.msra.mxu0 0.0
    %823 = vmatprep.subr.mxu0 0.0
    %824 = vmatpush1.msra.mxu0 0.0
    %825 = vmatprep.subr.mxu0 0.0
    %826 = vmatpush1.msra.mxu0 0.0
    %827 = vmatprep.subr.mxu0 0.0
    %828 = vmatpush1.msra.mxu0 0.0
    %829 = vmatprep.subr.mxu0 0.0
    %830 = vmatpush1.msra.mxu0 0.0
    %831 = vmatprep.mubr.f32.mxu0 0.0
    %832 = vmatmul.mubr.f32.gmra.mrb[0].mxu0 %v765
    %v833 = vpop.f32.mrb[0].mxu0
    %v834 = vadd.f32 0.0, %v833
    %v835 = vpop.f32.mrb[0].mxu0
    %836 = vdwg.mxu0
    %s837 = scalar_lea.vmem [#allocation10], 8
    %838 = vst.msk [vmem:[%s837] sm:$0xff] %vm86, %v834
    // Predicated region
    $region34: #{attention_head.1} parent=1 // pred_check
      _
    $region35: #{attention_head.1} parent=1 // pred_check_branch
      %840 = sbr.rel (0) target = $region37
    $region36: #{attention_head.1} parent=1 // pred_region
      %s842 = ssub.s32 256, 256
      %843 = vsyncadd [#allocation4], %s842
      %s844 = sshll.u32 [#allocation10], 4
      %s845 = int_to_ptr.vmem [resolvable:$true] %s844
      %850 = dma.vmem_to_hbm [thread:$0]  %s845, 256, %s4, [#allocation4], 128, 128, 8
    $region37: #{attention_head.1} parent=1 // pred_fallthru
      _
    // Predicated region
    $region38: #{attention_head.1} parent=1 // pred_check
      _
    $region39: #{attention_head.1} parent=1 // pred_check_branch
      %852 = sbr.rel (0) target = $region41
    $region40: #{attention_head.1} parent=1 // pred_region
      %853 = dma.done [#allocation4], 256
    $region41: #{attention_head.1} parent=1 // pred_fallthru
      _
    %854 = vsyncpa [#allocation3], 1
    %855 = vsyncpa [#allocation6], 1
    %856 = vsyncpa [#allocation9], 1
    %857 = vsyncpa [#allocation4], 1

</llo_original>
